<compile_context>
chip_gen: v6e
topology: v6e:2x2x1
jax: 0.10.0
libtpu: 0.0.40
codegen_flags: <defaults>
</compile_context>

<pallas_src>
import functools

import jax
import jax.numpy as jnp
from jax.experimental import pallas as pl
from jax.experimental.pallas import tpu as pltpu


def _round_up(x, m):
    return (x + m - 1) // m * m


def _round_down(x, m):
    return (x // m) * m


def _vst_clip_kernel(video_ref, text_ref,
                     wf_ref, bf_ref,
                     wcv_ref, wct_ref, bc_ref,
                     logits_ref, vfeat_ref,
                     acc_ref, *, thw, tk, lw, inv_thw, ragged):
    k = pl.program_id(1)
    nk = pl.num_programs(1)
    bb, c, _ = acc_ref.shape
    n_inner = tk // lw

    @pl.when(k == 0)
    def _init():
        acc_ref[...] = jnp.zeros_like(acc_ref)

    def _accumulate(mask_tail):
        # Stream the (bb, c, tk) block in LW-wide lane slices; pure VPU adds
        # into a register carry, one scratch update per grid step.
        if mask_tail:
            lane = jax.lax.broadcasted_iota(jnp.int32, (bb, c, lw), 2)

        def body(i, partial):
            off = pl.multiple_of(i * lw, lw)
            sl = video_ref[:, :, pl.ds(off, lw)].astype(jnp.float32)
            if mask_tail:
                # zero out lanes past the true end of T*H*W (ragged last block)
                valid = thw - k * tk - i * lw
                sl = jnp.where(lane < valid, sl, 0.0)
            return partial + sl

        partial = jax.lax.fori_loop(0, n_inner, body,
                                    jnp.zeros((bb, c, lw), jnp.float32))
        acc_ref[...] += partial

    if ragged:
        @pl.when(k == nk - 1)
        def _tail():
            _accumulate(True)

        @pl.when(k < nk - 1)
        def _steady():
            _accumulate(False)
    else:
        _accumulate(False)

    @pl.when(k == nk - 1)
    def _finalize():
        # single cross-lane reduce (XLU) + tiny MXU matmuls, once per batch tile
        pooled = jnp.sum(acc_ref[...], axis=-1) * inv_thw                    # (BB, C)

        # frozen backbone proxy + video_embed (folded on host): pooled -> hid
        vfeat = (jnp.dot(pooled, wf_ref[...],
                         preferred_element_type=jnp.float32) + bf_ref[...])  # (BB, HID)

        # classifier on concat([video_features, text_features], dim=1)
        logits = (jnp.dot(vfeat, wcv_ref[...], preferred_element_type=jnp.float32)
                  + jnp.dot(text_ref[...], wct_ref[...],
                            preferred_element_type=jnp.float32)
                  + bc_ref[...])                                             # (BB, NCp)

        vfeat_ref[...] = vfeat.astype(vfeat_ref.dtype)
        logits_ref[...] = logits.astype(logits_ref.dtype)


def vst_with_clip_forward(video, text_features, params, *,
                          video_block_bytes=4 * 1024 * 1024,
                          max_batch_block=8,
                          vmem_limit_bytes=32 * 1024 * 1024):
    """video: (B, T, C, H, W); text_features: (B, hid_dim) f32 (CLIP proxy).

    The video is streamed in its stored dtype (f32 here; supply bf16 from the
    producer for a genuine ~2x HBM-bandwidth win) and accumulated in f32.
    """
    B, T, C, H, W = video.shape
    THW = T * H * W
    # torch .view(B, C, T, H, W) on a contiguous tensor == row-major reshape.
    v = jnp.reshape(video, (B, C, THW))

    # ---- host-side param prep: fold frozen backbone proxy into video_embed ----
    wb, bb_, we, be = params["wb"], params["bb"], params["we"], params["be"]
    wcv, wct, bc = params["wcv"], params["wct"], params["bc"]
    w_fold = (wb @ we).astype(jnp.float32)            # (C, HID)
    b_fold = (bb_ @ we + be).astype(jnp.float32)      # (1, HID)
    HID = we.shape[1]
    NC = wcv.shape[1]

    # pad the (tiny) classifier weights to a lane-dense logits width
    NC_pad = _round_up(NC, 128)
    if NC_pad != NC:
        wcv_p = jnp.pad(wcv, ((0, 0), (0, NC_pad - NC)))
        wct_p = jnp.pad(wct, ((0, 0), (0, NC_pad - NC)))
        bc_p = jnp.pad(bc, ((0, 0), (0, NC_pad - NC)))
    else:
        wcv_p, wct_p, bc_p = wcv, wct, bc

    # ---- batch tiling: BB divides B (no zero-batch streaming, no batch pad);
    #      prefer n_b >= 2 so both v7x TensorCores get work. ----
    BB = 1
    for cand in range(min(max_batch_block, B), 0, -1):
        if B % cand == 0 and (B == 1 or B // cand >= 2):
            BB = cand
            break
    n_b = B // BB
    # TODO(synk): for B == 1, split the T*H*W reduction across cores instead.

    # ---- reduction tiling ----
    itemsize = jnp.dtype(v.dtype).itemsize
    tk_cap = _round_up(THW, 128)
    # inner lane width: keep the per-iteration register tile <= ~64 KiB (16 vregs)
    lw = max(128, min(2048, _round_down(64 * 1024 // (BB * C * 4), 128), tk_cap))
    raw_tk = int(video_block_bytes) // (BB * C * itemsize)
    tk = max(lw, _round_down(raw_tk, lw))
    tk = min(tk, _round_up(tk_cap, lw))
    n_k = pl.cdiv(THW, tk)
    ragged = (THW % tk) != 0

    # tiny per-batch arrays -> (n_b, BB, .) so the batch block equals the full
    # middle dim (satisfies the (8,128) block rule for any BB dividing B).
    text3 = jnp.reshape(text_features.astype(jnp.float32), (n_b, BB, HID))

    kernel = functools.partial(
        _vst_clip_kernel,
        thw=THW, tk=tk, lw=lw, inv_thw=1.0 / float(THW), ragged=ragged)

    param_bytes = 4 * (w_fold.size + b_fold.size + wcv_p.size + wct_p.size + bc_p.size)
    cost = pl.CostEstimate(
        flops=int(B * C * THW + 2 * B * (C * HID + 2 * HID * NC_pad)),
        transcendentals=0,
        bytes_accessed=int(v.size * itemsize + text3.size * 4 + param_bytes
                           + B * (HID + NC_pad) * 4),
    )

    logits3, vfeat3 = pl.pallas_call(
        kernel,
        out_shape=(jax.ShapeDtypeStruct((n_b, BB, NC_pad), jnp.float32),
                   jax.ShapeDtypeStruct((n_b, BB, HID), jnp.float32)),
        grid=(n_b, n_k),
        in_specs=[
            # video: streamed over the reduction axis (double-buffered DMA)
            pl.BlockSpec((BB, C, tk), lambda b, k: (b, 0, k)),
            # text + params: index_maps ignore k -> VMEM-resident across the
            # whole reduction; params ignore b as well (DMA'd once).
            pl.BlockSpec((None, BB, HID), lambda b, k: (b, 0, 0)),
            pl.BlockSpec((C, HID), lambda b, k: (0, 0)),
            pl.BlockSpec((1, HID), lambda b, k: (0, 0)),
            pl.BlockSpec((HID, NC_pad), lambda b, k: (0, 0)),
            pl.BlockSpec((HID, NC_pad), lambda b, k: (0, 0)),
            pl.BlockSpec((1, NC_pad), lambda b, k: (0, 0)),
        ],
        out_specs=(
            pl.BlockSpec((None, BB, NC_pad), lambda b, k: (b, 0, 0)),
            pl.BlockSpec((None, BB, HID), lambda b, k: (b, 0, 0)),
        ),
        scratch_shapes=[pltpu.VMEM((BB, C, lw), jnp.float32)],
        compiler_params=pltpu.CompilerParams(
            dimension_semantics=("parallel", "arbitrary"),
            vmem_limit_bytes=int(vmem_limit_bytes)),
        cost_estimate=cost,
    )(v, text3, w_fold, b_fold, wcv_p, wct_p, bc_p)

    logits = jnp.reshape(logits3, (B, NC_pad))[:, :NC]
    vfeat = jnp.reshape(vfeat3, (B, HID))
    # forward returns (logits, video_features, text_features)
    return logits, vfeat, text_features


def make_params(key, C, in_features, hid_dim, num_classes):
    ks = jax.random.split(key, 7)
    s = 0.02
    return {
        # frozen backbone proxy projection: C -> in_features
        "wb": s * jax.random.normal(ks[0], (C, in_features), jnp.float32),
        "bb": s * jax.random.normal(ks[1], (1, in_features), jnp.float32),
        # video_embed: in_features -> hid_dim
        "we": s * jax.random.normal(ks[2], (in_features, hid_dim), jnp.float32),
        "be": s * jax.random.normal(ks[3], (1, hid_dim), jnp.float32),
        # classifier: (2*hid_dim -> num_classes), split into video/text halves
        "wcv": s * jax.random.normal(ks[4], (hid_dim, num_classes), jnp.float32),
        "wct": s * jax.random.normal(ks[5], (hid_dim, num_classes), jnp.float32),
        "bc": s * jax.random.normal(ks[6], (1, num_classes), jnp.float32),
    }


def reference_forward(video, text_features, params):
    B, T, C, H, W = video.shape
    v = jnp.reshape(video, (B, C, T * H * W))
    pooled = v.mean(-1)
    backbone = pooled @ params["wb"] + params["bb"]
    vfeat = backbone @ params["we"] + params["be"]
    w_cls = jnp.concatenate([params["wcv"], params["wct"]], axis=0)
    logits = jnp.concatenate([vfeat, text_features], axis=1) @ w_cls + params["bc"]
    return logits, vfeat, text_features


if __name__ == "__main__":
    # Small shapes consistent with the module's forward:
    B, T, C, H, W = 2, 8, 4, 16, 16
    in_features = 64      # stands in for swin3d_b head.in_features (1024)
    hid_dim = 32          # stands in for 512 (CLIP text dim == hid_dim)
    num_classes = 10

    key = jax.random.PRNGKey(0)
    k_video, k_text, k_params = jax.random.split(key, 3)

    video = jax.random.normal(k_video, (B, T, C, H, W), jnp.float32)
    # precomputed frozen CLIP text embeddings (see TODO above)
    text_features = jax.random.normal(k_text, (B, hid_dim), jnp.float32)
    params = make_params(k_params, C, in_features, hid_dim, num_classes)

    logits, vfeat, tfeat = jax.block_until_ready(
        vst_with_clip_forward(video, text_features, params))

    ref_logits, ref_vfeat, ref_tfeat = reference_forward(video, text_features, params)
    assert logits.shape == (B, num_classes)
    assert vfeat.shape == (B, hid_dim)
    assert tfeat.shape == (B, hid_dim)
    assert jnp.allclose(logits, ref_logits, atol=1e-5, rtol=1e-5)
    assert jnp.allclose(vfeat, ref_vfeat, atol=1e-5, rtol=1e-5)
    assert jnp.allclose(tfeat, ref_tfeat)

    print("KERNEL_OK")
</pallas_src>

<mosaic_0001>
module attributes {stable_mosaic.version = 11 : i64} {
  func.func @_vst_clip_kernel(%arg0: i32, %arg1: i32, %arg2: memref<1x4x2048xf32, #tpu.memory_space<vmem>>, %arg3: memref<1x1x32xf32, #tpu.memory_space<vmem>>, %arg4: memref<4x32xf32, #tpu.memory_space<vmem>>, %arg5: memref<1x32xf32, #tpu.memory_space<vmem>>, %arg6: memref<32x128xf32, #tpu.memory_space<vmem>>, %arg7: memref<32x128xf32, #tpu.memory_space<vmem>>, %arg8: memref<1x128xf32, #tpu.memory_space<vmem>>, %arg9: memref<1x1x128xf32, #tpu.memory_space<vmem>>, %arg10: memref<1x1x32xf32, #tpu.memory_space<vmem>>, %arg11: memref<1x4x2048xf32, #tpu.memory_space<vmem>>) attributes {dimension_semantics = [#tpu.dimension_semantics<parallel>, #tpu.dimension_semantics<arbitrary>], iteration_bounds = array<i64: 2, 1>, scalar_prefetch = 0 : i64, scratch_operands = 1 : i64, tpu.core_type = #tpu.core_type<tc>, window_params = [{transform_indices = @transform_0, window_bounds = array<i64: 1, 4, 2048>}, {transform_indices = @transform_1, window_bounds = array<i64: 1, 1, 32>}, {pipeline_mode = #tpu.pipeline_mode<synchronous>, transform_indices = @transform_2, window_bounds = array<i64: 4, 32>}, {pipeline_mode = #tpu.pipeline_mode<synchronous>, transform_indices = @transform_3, window_bounds = array<i64: 1, 32>}, {pipeline_mode = #tpu.pipeline_mode<synchronous>, transform_indices = @transform_4, window_bounds = array<i64: 32, 128>}, {pipeline_mode = #tpu.pipeline_mode<synchronous>, transform_indices = @transform_5, window_bounds = array<i64: 32, 128>}, {pipeline_mode = #tpu.pipeline_mode<synchronous>, transform_indices = @transform_6, window_bounds = array<i64: 1, 128>}, {transform_indices = @transform_7, window_bounds = array<i64: 1, 1, 128>}, {transform_indices = @transform_8, window_bounds = array<i64: 1, 1, 32>}]} {
    %c0_i32 = arith.constant 0 : i32
    %0 = arith.cmpi eq, %arg1, %c0_i32 : i32
    %1 = arith.extui %0 : i1 to i32
    %c0_i32_0 = arith.constant 0 : i32
    %2 = arith.cmpi ne, %1, %c0_i32_0 : i32
    scf.if %2 {
      %cst_11 = arith.constant 0.000000e+00 : f32
      %15 = vector.broadcast %cst_11 : f32 to vector<1x4x2048xf32>
      %c0_12 = arith.constant 0 : index
      %c0_13 = arith.constant 0 : index
      %c0_14 = arith.constant 0 : index
      %16 = vector.load %arg11[%c0_12, %c0_13, %c0_14] : memref<1x4x2048xf32, #tpu.memory_space<vmem>>, vector<1x4x2048xf32>
      tpu.vector_store %arg11[%c0_12, %c0_13, %c0_14], %15 {strides = array<i32>} : memref<1x4x2048xf32, #tpu.memory_space<vmem>>, vector<1x4x2048xf32>,
    } else {
    }
    %cst = arith.constant 0.000000e+00 : f32
    %3 = vector.broadcast %cst : f32 to vector<1x4x2048xf32>
    %c0_i32_1 = arith.constant 0 : i32
    %c2048_i32 = arith.constant 2048 : i32
    %4 = arith.muli %c0_i32_1, %c2048_i32 : i32
    %5 = tpu.assume_multiple %4, 2048 : i32
    %c0 = arith.constant 0 : index
    %c0_2 = arith.constant 0 : index
    %6 = arith.index_cast %5 : i32 to index
    %7 = vector.load %arg2[%c0, %c0_2, %6] : memref<1x4x2048xf32, #tpu.memory_space<vmem>>, vector<1x4x2048xf32>
    %8 = arith.addf %3, %7 : vector<1x4x2048xf32>
    %c1_i32 = arith.constant 1 : i32
    %c0_3 = arith.constant 0 : index
    %c0_4 = arith.constant 0 : index
    %c0_5 = arith.constant 0 : index
    %9 = vector.load %arg11[%c0_3, %c0_4, %c0_5] : memref<1x4x2048xf32, #tpu.memory_space<vmem>>, vector<1x4x2048xf32>
    %10 = arith.addf %9, %8 : vector<1x4x2048xf32>
    %c0_6 = arith.constant 0 : index
    %c0_7 = arith.constant 0 : index
    %c0_8 = arith.constant 0 : index
    %11 = vector.load %arg11[%c0_6, %c0_7, %c0_8] : memref<1x4x2048xf32, #tpu.memory_space<vmem>>, vector<1x4x2048xf32>
    tpu.vector_store %arg11[%c0_6, %c0_7, %c0_8], %10 {strides = array<i32>} : memref<1x4x2048xf32, #tpu.memory_space<vmem>>, vector<1x4x2048xf32>,
    %c0_i32_9 = arith.constant 0 : i32
    %12 = arith.cmpi eq, %arg1, %c0_i32_9 : i32
    %13 = arith.extui %12 : i1 to i32
    %c0_i32_10 = arith.constant 0 : i32
    %14 = arith.cmpi ne, %13, %c0_i32_10 : i32
    scf.if %14 {
      %c0_11 = arith.constant 0 : index
      %c0_12 = arith.constant 0 : index
      %c0_13 = arith.constant 0 : index
      %15 = vector.load %arg11[%c0_11, %c0_12, %c0_13] : memref<1x4x2048xf32, #tpu.memory_space<vmem>>, vector<1x4x2048xf32>
      %cst_14 = arith.constant dense<0.000000e+00> : vector<1x4xf32>
      %16 = vector.multi_reduction <add>, %15, %cst_14 [2] : vector<1x4x2048xf32> to vector<1x4xf32>
      %cst_15 = arith.constant 4.8828125E-4 : f32
      %17 = vector.broadcast %cst_15 : f32 to vector<1x4xf32>
      %18 = arith.mulf %16, %17 : vector<1x4xf32>
      %c0_16 = arith.constant 0 : index
      %c0_17 = arith.constant 0 : index
      %19 = vector.load %arg4[%c0_16, %c0_17] : memref<4x32xf32, #tpu.memory_space<vmem>>, vector<4x32xf32>
      %cst_18 = arith.constant dense<0.000000e+00> : vector<1x32xf32>
      %20 = tpu.matmul %18, %19, %cst_18 {dimension_numbers = #tpu.dot_dimension_numbers<[1], [0], [0], [1], [0, 0, 1, 1], [], []>} : vector<1x4xf32>, vector<4x32xf32>, vector<1x32xf32> -> vector<1x32xf32>
      %c0_19 = arith.constant 0 : index
      %c0_20 = arith.constant 0 : index
      %21 = vector.load %arg5[%c0_19, %c0_20] : memref<1x32xf32, #tpu.memory_space<vmem>>, vector<1x32xf32>
      %22 = arith.addf %20, %21 : vector<1x32xf32>
      %c0_21 = arith.constant 0 : index
      %c0_22 = arith.constant 0 : index
      %23 = vector.load %arg6[%c0_21, %c0_22] : memref<32x128xf32, #tpu.memory_space<vmem>>, vector<32x128xf32>
      %cst_23 = arith.constant dense<0.000000e+00> : vector<1x128xf32>
      %24 = tpu.matmul %22, %23, %cst_23 {dimension_numbers = #tpu.dot_dimension_numbers<[1], [0], [0], [1], [0, 0, 1, 1], [], []>} : vector<1x32xf32>, vector<32x128xf32>, vector<1x128xf32> -> vector<1x128xf32>
      %c0_24 = arith.constant 0 : index
      %c0_25 = arith.constant 0 : index
      %c0_26 = arith.constant 0 : index
      %25 = vector.load %arg3[%c0_24, %c0_25, %c0_26] : memref<1x1x32xf32, #tpu.memory_space<vmem>>, vector<1x1x32xf32>
      %26 = vector.shape_cast %25 : vector<1x1x32xf32> to vector<1x32xf32>
      %c0_27 = arith.constant 0 : index
      %c0_28 = arith.constant 0 : index
      %27 = vector.load %arg7[%c0_27, %c0_28] : memref<32x128xf32, #tpu.memory_space<vmem>>, vector<32x128xf32>
      %cst_29 = arith.constant dense<0.000000e+00> : vector<1x128xf32>
      %28 = tpu.matmul %26, %27, %cst_29 {dimension_numbers = #tpu.dot_dimension_numbers<[1], [0], [0], [1], [0, 0, 1, 1], [], []>} : vector<1x32xf32>, vector<32x128xf32>, vector<1x128xf32> -> vector<1x128xf32>
      %29 = arith.addf %24, %28 : vector<1x128xf32>
      %c0_30 = arith.constant 0 : index
      %c0_31 = arith.constant 0 : index
      %30 = vector.load %arg8[%c0_30, %c0_31] : memref<1x128xf32, #tpu.memory_space<vmem>>, vector<1x128xf32>
      %31 = arith.addf %29, %30 : vector<1x128xf32>
      %c0_32 = arith.constant 0 : index
      %c0_33 = arith.constant 0 : index
      %c0_34 = arith.constant 0 : index
      %32 = vector.load %arg10[%c0_32, %c0_33, %c0_34] : memref<1x1x32xf32, #tpu.memory_space<vmem>>, vector<1x1x32xf32>
      %33 = vector.shape_cast %32 : vector<1x1x32xf32> to vector<1x32xf32>
      %34 = vector.shape_cast %22 : vector<1x32xf32> to vector<1x1x32xf32>
      tpu.vector_store %arg10[%c0_32, %c0_33, %c0_34], %34 {strides = array<i32>} : memref<1x1x32xf32, #tpu.memory_space<vmem>>, vector<1x1x32xf32>,
      %c0_35 = arith.constant 0 : index
      %c0_36 = arith.constant 0 : index
      %c0_37 = arith.constant 0 : index
      %35 = vector.load %arg9[%c0_35, %c0_36, %c0_37] : memref<1x1x128xf32, #tpu.memory_space<vmem>>, vector<1x1x128xf32>
      %36 = vector.shape_cast %35 : vector<1x1x128xf32> to vector<1x128xf32>
      %37 = vector.shape_cast %31 : vector<1x128xf32> to vector<1x1x128xf32>
      tpu.vector_store %arg9[%c0_35, %c0_36, %c0_37], %37 {strides = array<i32>} : memref<1x1x128xf32, #tpu.memory_space<vmem>>, vector<1x1x128xf32>,
    } else {
    }
    return
  }
  func.func @transform_0(%arg0: i32, %arg1: i32) -> (i32, i32, i32) {
    %c0_i32 = arith.constant 0 : i32
    %c0_i32_0 = arith.constant 0 : i32
    return %arg0, %c0_i32, %arg1 : i32, i32, i32
  }
  func.func @transform_1(%arg0: i32, %arg1: i32) -> (i32, i32, i32) {
    %c0_i32 = arith.constant 0 : i32
    %c0_i32_0 = arith.constant 0 : i32
    %c0_i32_1 = arith.constant 0 : i32
    return %arg0, %c0_i32, %c0_i32_0 : i32, i32, i32
  }
  func.func @transform_2(%arg0: i32, %arg1: i32) -> (i32, i32) {
    %c0_i32 = arith.constant 0 : i32
    %c0_i32_0 = arith.constant 0 : i32
    %c0_i32_1 = arith.constant 0 : i32
    return %c0_i32, %c0_i32_0 : i32, i32
  }
  func.func @transform_3(%arg0: i32, %arg1: i32) -> (i32, i32) {
    %c0_i32 = arith.constant 0 : i32
    %c0_i32_0 = arith.constant 0 : i32
    %c0_i32_1 = arith.constant 0 : i32
    return %c0_i32, %c0_i32_0 : i32, i32
  }
  func.func @transform_4(%arg0: i32, %arg1: i32) -> (i32, i32) {
    %c0_i32 = arith.constant 0 : i32
    %c0_i32_0 = arith.constant 0 : i32
    %c0_i32_1 = arith.constant 0 : i32
    return %c0_i32, %c0_i32_0 : i32, i32
  }
  func.func @transform_5(%arg0: i32, %arg1: i32) -> (i32, i32) {
    %c0_i32 = arith.constant 0 : i32
    %c0_i32_0 = arith.constant 0 : i32
    %c0_i32_1 = arith.constant 0 : i32
    return %c0_i32, %c0_i32_0 : i32, i32
  }
  func.func @transform_6(%arg0: i32, %arg1: i32) -> (i32, i32) {
    %c0_i32 = arith.constant 0 : i32
    %c0_i32_0 = arith.constant 0 : i32
    %c0_i32_1 = arith.constant 0 : i32
    return %c0_i32, %c0_i32_0 : i32, i32
  }
  func.func @transform_7(%arg0: i32, %arg1: i32) -> (i32, i32, i32) {
    %c0_i32 = arith.constant 0 : i32
    %c0_i32_0 = arith.constant 0 : i32
    %c0_i32_1 = arith.constant 0 : i32
    return %arg0, %c0_i32, %c0_i32_0 : i32, i32, i32
  }
  func.func @transform_8(%arg0: i32, %arg1: i32) -> (i32, i32, i32) {
    %c0_i32 = arith.constant 0 : i32
    %c0_i32_0 = arith.constant 0 : i32
    %c0_i32_1 = arith.constant 0 : i32
    return %arg0, %c0_i32, %c0_i32_0 : i32, i32, i32
  }
}

</mosaic_0001>

<llo_original>
// kernel: tpu_custom_call.1
$region0: #{tpu_custom_call.1}
  #allocation0 [shape = 'u32[]', space=smem, size = 0x4, offset = 0x4, fixed_abs, tag = 'smem constant byte address 0x4 - core index']
  #allocation1 [shape = 'u32[144,128]{1,0:T(1,128)}', space=vmem, size = 0x12000, scoped, tag = 'internal scratch']
  #allocation2 [shape = 'f32[1,4,2048]{2,1,0:T(4,128)}', space=vmem, size = 0x8000, scoped, tag = 'scratch operand']
  %s0 = inlined_call_operand.hbm [shape: f32[2,4,2048], index: 0, kind: input, shape index: {}]
  %s1 = inlined_call_operand.hbm [shape: f32[2,1,32], index: 1, kind: input, shape index: {}]
  %s2 = inlined_call_operand.hbm [shape: f32[4,32], index: 2, kind: input, shape index: {}]
  %s3 = inlined_call_operand.vmem [shape: f32[1,32], index: 3, kind: input, shape index: {}]
  %s4 = inlined_call_operand.hbm [shape: f32[32,128], index: 4, kind: input, shape index: {}]
  %s5 = inlined_call_operand.hbm [shape: f32[32,128], index: 5, kind: input, shape index: {}]
  %s6 = inlined_call_operand.vmem [shape: f32[1,128], index: 6, kind: input, shape index: {}]
  %s7 = inlined_call_operand.hbm [shape: f32[2,1,128], index: 7, kind: output, shape index: {0}]
  %s8 = inlined_call_operand.hbm [shape: f32[2,1,32], index: 8, kind: output, shape index: {1}]
  %9 = xla_tuple %s7, %s8
  %s10 = sld [smem:[#allocation0]]
  $region97: #{tpu_custom_call.1} parent=0
    _
  %s12 = ssub.s32 1, %s10
  %s13 = scalar_select 0, %s12, %s10
  $region1: #{tpu_custom_call.1} parent=0
    #allocation3 [shape = 'u8[65536]{0}', space=vmem, size = 0x10000, scoped, tag = 'input window, operand 0']
    #allocation4 [shape = 's32[2]{0}', space=sflag, size = 0x8, scoped, tag = 'scoped memory for tpu_custom_call.1']
    #allocation5 [shape = 's32[2]{0}', space=sflag, size = 0x8, scoped, tag = 'scoped memory for tpu_custom_call.1']
    #allocation6 [shape = 'u8[1024]{0}', space=vmem, size = 0x400, scoped, tag = 'input window, operand 1']
    #allocation7 [shape = 's32[2]{0}', space=sflag, size = 0x8, scoped, tag = 'scoped memory for tpu_custom_call.1']
    #allocation8 [shape = 'u8[2048]{0}', space=vmem, size = 0x800, scoped, tag = 'input window, operand 2, single buffered']
    #allocation9 [shape = 'u8[16384]{0}', space=vmem, size = 0x4000, scoped, tag = 'input window, operand 4, single buffered']
    #allocation10 [shape = 's32[1]{0}', space=sflag, size = 0x4, scoped, tag = 'scoped memory for tpu_custom_call.1']
    #allocation11 [shape = 'u8[16384]{0}', space=vmem, size = 0x4000, scoped, tag = 'input window, operand 5, single buffered']
    #allocation12 [shape = 'u8[1024]{0}', space=vmem, size = 0x400, scoped, tag = 'output window, operand 0']
    #allocation13 [shape = 'u8[1024]{0}', space=vmem, size = 0x400, scoped, tag = 'output window, operand 1']
    #allocation14 [shape = 's32[2]{0}', space=sflag, size = 0x8, scoped, tag = 'scoped memory for tpu_custom_call.1']
    %14 = vsyncpa [#allocation4], 0
    %s15 = scalar_lea.sflag [#allocation4], 1
    %16 = vsyncpa %s15, 0
    %17 = vsyncpa [#allocation7], 0
    %s18 = scalar_lea.sflag [#allocation7], 1
    %19 = vsyncpa %s18, 0
    %20 = vsyncpa [#allocation10], 0
    %21 = vsyncpa [#allocation5], 0
    %s22 = scalar_lea.sflag [#allocation5], 1
    %23 = vsyncpa %s22, 0
    %24 = vsyncpa [#allocation14], 0
    %s25 = scalar_lea.sflag [#allocation14], 1
    %26 = vsyncpa %s25, 0
    loop: start=0, step=1, limit=4
    $region2: #{tpu_custom_call.1} parent=1 // loop_pre_header
      _
    $region3: #{tpu_custom_call.1} parent=1 // loop_header
      %s28 = sphi 0, %s32
      %p29 = scmp.ge.s32.totalorder %s28, 4
      %s35 = sphi 0, %s47
      %s36 = sphi 0, %s43
      %s37 = sphi 0, %s35
      %s38 = sphi 0, %s36
      %s39 = sphi 0, %s37
      %s40 = sphi 0, %s38
      %s52 = sphi 0, %s54
      %s55 = sphi 0, %s52
      %s56 = sphi 0, %s55
      %s72 = sphi 0, %s56
      %s78 = sphi 0, %s80
      %s81 = sphi 0, %s78
      %s82 = sphi 0, %s81
      %s98 = sphi 0, %s82
      %s102 = sphi 0, %s102
      %s104 = sphi 0, %s102
      %s105 = sphi 0, %s104
      %s119 = sphi 0, %s105
      %s123 = sphi 0, %s123
      %s125 = sphi 0, %s123
      %s126 = sphi 0, %s125
      %s140 = sphi 0, %s126
      %s144 = sphi 0, %s144
      %s146 = sphi 0, %s144
      %s147 = sphi 0, %s146
      %s161 = sphi 0, %s147
      %s165 = sphi 0, %s165
      %s167 = sphi 0, %s165
      %s168 = sphi 0, %s167
      %s182 = sphi 0, %s168
      %s186 = sphi 0, %s186
      %s188 = sphi 0, %s186
      %s189 = sphi 0, %s188
      %s203 = sphi 0, %s189
      %s209 = sphi 0, %s211
      %s212 = sphi 0, %s209
      %s213 = sphi 0, %s212
      %s229 = sphi 0, %s213
      %s235 = sphi 0, %s237
      %s238 = sphi 0, %s235
      %s239 = sphi 0, %s238
      %s255 = sphi 0, %s239
    $region4: #{tpu_custom_call.1} parent=1 // loop_header_branch
      %31 = sbr.rel (%p29) target = $region8
    $region5: #{tpu_custom_call.1} parent=1 // loop_body
      %s33 = ssub.s32 %s28, 1
      %s34 = ssub.s32 %s28, 2
      %s41 = sadd.s32 1, %s36
      %p42 = scmp.ge.s32.totalorder %s41, 1
      %s43 = scalar_select %p42, 0, %s41
      %s44 = sadd.s32 1, %s35
      %s45 = scalar_select %p42, %s44, %s35
      %p46 = scmp.ge.s32.totalorder %s45, 2
      %s47 = scalar_select %p46, 0, %s45
      %s48 = ssub.s32 %s35, %s47
      %s49 = ssub.s32 %s36, %s43
      %s50 = sor.u32 %s48, %s49
      %p51 = scmp.eq.s32.totalorder %s50, 0
      %s53 = sadd.s32 %s52, 1
      %s54 = scalar_select %p51, %s52, %s53
      %p57 = pneg %p51
      %p58 = scmp.eq.s32.totalorder %s28, 1
      %p59 = por %p57, %p58
      %p60 = scmp.ne.s32.totalorder %s52, %s55
      %p61 = scmp.eq.s32.totalorder %s28, 0
      %p62 = por %p60, %p61
      %p63 = scmp.ne.s32.totalorder %s52, %s55
      %p64 = scmp.eq.s32.totalorder %s33, 1
      %p65 = por %p63, %p64
      %p66 = scmp.ne.s32.totalorder %s55, %s56
      %p67 = scmp.eq.s32.totalorder %s33, 0
      %p68 = por %p66, %p67
      %p69 = scmp.ne.s32.totalorder %s55, %s56
      %p70 = scmp.eq.s32.totalorder %s34, 1
      %p71 = por %p69, %p70
      %p73 = scmp.ne.s32.totalorder %s56, %s72
      %p74 = scmp.eq.s32.totalorder %s34, 0
      %p75 = por %p73, %p74
      %s76 = ssub.s32 %s35, %s47
      %p77 = scmp.eq.s32.totalorder %s76, 0
      %s79 = sadd.s32 %s78, 1
      %s80 = scalar_select %p77, %s78, %s79
      %p83 = pneg %p77
      %p84 = scmp.eq.s32.totalorder %s28, 1
      %p85 = por %p83, %p84
      %p86 = scmp.ne.s32.totalorder %s78, %s81
      %p87 = scmp.eq.s32.totalorder %s28, 0
      %p88 = por %p86, %p87
      %p89 = scmp.ne.s32.totalorder %s78, %s81
      %p90 = scmp.eq.s32.totalorder %s33, 1
      %p91 = por %p89, %p90
      %p92 = scmp.ne.s32.totalorder %s81, %s82
      %p93 = scmp.eq.s32.totalorder %s33, 0
      %p94 = por %p92, %p93
      %p95 = scmp.ne.s32.totalorder %s81, %s82
      %p96 = scmp.eq.s32.totalorder %s34, 1
      %p97 = por %p95, %p96
      %p99 = scmp.ne.s32.totalorder %s82, %s98
      %p100 = scmp.eq.s32.totalorder %s34, 0
      %p101 = por %p99, %p100
      %s103 = sadd.s32 %s102, 1
      %p106 = scmp.eq.s32.totalorder %s28, 1
      %p107 = scmp.ne.s32.totalorder %s102, %s104
      %p108 = scmp.eq.s32.totalorder %s28, 0
      %p109 = por %p107, %p108
      %p110 = scmp.ne.s32.totalorder %s102, %s104
      %p111 = scmp.eq.s32.totalorder %s33, 1
      %p112 = por %p110, %p111
      %p113 = scmp.ne.s32.totalorder %s104, %s105
      %p114 = scmp.eq.s32.totalorder %s33, 0
      %p115 = por %p113, %p114
      %p116 = scmp.ne.s32.totalorder %s104, %s105
      %p117 = scmp.eq.s32.totalorder %s34, 1
      %p118 = por %p116, %p117
      %p120 = scmp.ne.s32.totalorder %s105, %s119
      %p121 = scmp.eq.s32.totalorder %s34, 0
      %p122 = por %p120, %p121
      %s124 = sadd.s32 %s123, 1
      %p127 = scmp.eq.s32.totalorder %s28, 1
      %p128 = scmp.ne.s32.totalorder %s123, %s125
      %p129 = scmp.eq.s32.totalorder %s28, 0
      %p130 = por %p128, %p129
      %p131 = scmp.ne.s32.totalorder %s123, %s125
      %p132 = scmp.eq.s32.totalorder %s33, 1
      %p133 = por %p131, %p132
      %p134 = scmp.ne.s32.totalorder %s125, %s126
      %p135 = scmp.eq.s32.totalorder %s33, 0
      %p136 = por %p134, %p135
      %p137 = scmp.ne.s32.totalorder %s125, %s126
      %p138 = scmp.eq.s32.totalorder %s34, 1
      %p139 = por %p137, %p138
      %p141 = scmp.ne.s32.totalorder %s126, %s140
      %p142 = scmp.eq.s32.totalorder %s34, 0
      %p143 = por %p141, %p142
      %s145 = sadd.s32 %s144, 1
      %p148 = scmp.eq.s32.totalorder %s28, 1
      %p149 = scmp.ne.s32.totalorder %s144, %s146
      %p150 = scmp.eq.s32.totalorder %s28, 0
      %p151 = por %p149, %p150
      %p152 = scmp.ne.s32.totalorder %s144, %s146
      %p153 = scmp.eq.s32.totalorder %s33, 1
      %p154 = por %p152, %p153
      %p155 = scmp.ne.s32.totalorder %s146, %s147
      %p156 = scmp.eq.s32.totalorder %s33, 0
      %p157 = por %p155, %p156
      %p158 = scmp.ne.s32.totalorder %s146, %s147
      %p159 = scmp.eq.s32.totalorder %s34, 1
      %p160 = por %p158, %p159
      %p162 = scmp.ne.s32.totalorder %s147, %s161
      %p163 = scmp.eq.s32.totalorder %s34, 0
      %p164 = por %p162, %p163
      %s166 = sadd.s32 %s165, 1
      %p169 = scmp.eq.s32.totalorder %s28, 1
      %p170 = scmp.ne.s32.totalorder %s165, %s167
      %p171 = scmp.eq.s32.totalorder %s28, 0
      %p172 = por %p170, %p171
      %p173 = scmp.ne.s32.totalorder %s165, %s167
      %p174 = scmp.eq.s32.totalorder %s33, 1
      %p175 = por %p173, %p174
      %p176 = scmp.ne.s32.totalorder %s167, %s168
      %p177 = scmp.eq.s32.totalorder %s33, 0
      %p178 = por %p176, %p177
      %p179 = scmp.ne.s32.totalorder %s167, %s168
      %p180 = scmp.eq.s32.totalorder %s34, 1
      %p181 = por %p179, %p180
      %p183 = scmp.ne.s32.totalorder %s168, %s182
      %p184 = scmp.eq.s32.totalorder %s34, 0
      %p185 = por %p183, %p184
      %s187 = sadd.s32 %s186, 1
      %p190 = scmp.eq.s32.totalorder %s28, 1
      %p191 = scmp.ne.s32.totalorder %s186, %s188
      %p192 = scmp.eq.s32.totalorder %s28, 0
      %p193 = por %p191, %p192
      %p194 = scmp.ne.s32.totalorder %s186, %s188
      %p195 = scmp.eq.s32.totalorder %s33, 1
      %p196 = por %p194, %p195
      %p197 = scmp.ne.s32.totalorder %s188, %s189
      %p198 = scmp.eq.s32.totalorder %s33, 0
      %p199 = por %p197, %p198
      %p200 = scmp.ne.s32.totalorder %s188, %s189
      %p201 = scmp.eq.s32.totalorder %s34, 1
      %p202 = por %p200, %p201
      %p204 = scmp.ne.s32.totalorder %s189, %s203
      %p205 = scmp.eq.s32.totalorder %s34, 0
      %p206 = por %p204, %p205
      %s207 = ssub.s32 %s35, %s47
      %p208 = scmp.eq.s32.totalorder %s207, 0
      %s210 = sadd.s32 %s209, 1
      %s211 = scalar_select %p208, %s209, %s210
      %p214 = pneg %p208
      %p215 = scmp.eq.s32.totalorder %s28, 1
      %p216 = por %p214, %p215
      %p217 = scmp.ne.s32.totalorder %s209, %s212
      %p218 = scmp.eq.s32.totalorder %s28, 0
      %p219 = por %p217, %p218
      %p220 = scmp.ne.s32.totalorder %s209, %s212
      %p221 = scmp.eq.s32.totalorder %s33, 1
      %p222 = por %p220, %p221
      %p223 = scmp.ne.s32.totalorder %s212, %s213
      %p224 = scmp.eq.s32.totalorder %s33, 0
      %p225 = por %p223, %p224
      %p226 = scmp.ne.s32.totalorder %s212, %s213
      %p227 = scmp.eq.s32.totalorder %s34, 1
      %p228 = por %p226, %p227
      %p230 = scmp.ne.s32.totalorder %s213, %s229
      %p231 = scmp.eq.s32.totalorder %s34, 0
      %p232 = por %p230, %p231
      %s233 = ssub.s32 %s35, %s47
      %p234 = scmp.eq.s32.totalorder %s233, 0
      %s236 = sadd.s32 %s235, 1
      %s237 = scalar_select %p234, %s235, %s236
      %p240 = pneg %p234
      %p241 = scmp.eq.s32.totalorder %s28, 1
      %p242 = por %p240, %p241
      %p243 = scmp.ne.s32.totalorder %s235, %s238
      %p244 = scmp.eq.s32.totalorder %s28, 0
      %p245 = por %p243, %p244
      %p246 = scmp.ne.s32.totalorder %s235, %s238
      %p247 = scmp.eq.s32.totalorder %s33, 1
      %p248 = por %p246, %p247
      %p249 = scmp.ne.s32.totalorder %s238, %s239
      %p250 = scmp.eq.s32.totalorder %s33, 0
      %p251 = por %p249, %p250
      %p252 = scmp.ne.s32.totalorder %s238, %s239
      %p253 = scmp.eq.s32.totalorder %s34, 1
      %p254 = por %p252, %p253
      %p256 = scmp.ne.s32.totalorder %s239, %s255
      %p257 = scmp.eq.s32.totalorder %s34, 0
      %p258 = por %p256, %p257
      %p259 = scmp.le.s32.totalorder 1, %s28
      %p260 = scmp.lt.s32.totalorder %s28, 3
      %p261 = pnand %p259, %p260
      %p262 = pneg %p261
      // Predicated region
      $region9: #{tpu_custom_call.1} parent=5 // pred_check
        _
      $region10: #{tpu_custom_call.1} parent=5 // pred_check_branch
        %264 = sbr.rel (%p261) target = $region12
      $region11: #{tpu_custom_call.1} parent=5 // pred_region
        %s265 = ssub.s32 %s28, 1
        // Predicated region
        $region13: #{tpu_custom_call.1} parent=11 // pred_check
          %p266 = pneg %p115
        $region14: #{tpu_custom_call.1} parent=11 // pred_check_branch
          %268 = sbr.rel (%p266) target = $region16
        $region15: #{tpu_custom_call.1} parent=11 // pred_region
          %s270 = ssub.s32 64, 64
          %271 = vsyncadd [#allocation7], %s270
          %s273 = sshll.u32 [#allocation8], 4
          %s274 = int_to_ptr.vmem [resolvable:$true] %s273
          %276 = dma.hbm_to_vmem [thread:$0]  %s2, 64, %s274, [#allocation7]
        $region16: #{tpu_custom_call.1} parent=11 // pred_fallthru
          _
        // Predicated region
        $region17: #{tpu_custom_call.1} parent=11 // pred_check
          %p277 = pneg %p136
        $region18: #{tpu_custom_call.1} parent=11 // pred_check_branch
          %279 = sbr.rel (%p277) target = $region20
        $region19: #{tpu_custom_call.1} parent=11 // pred_region
          _
        $region20: #{tpu_custom_call.1} parent=11 // pred_fallthru
          _
        // Predicated region
        $region21: #{tpu_custom_call.1} parent=11 // pred_check
          %p280 = pneg %p157
        $region22: #{tpu_custom_call.1} parent=11 // pred_check_branch
          %282 = sbr.rel (%p280) target = $region24
        $region23: #{tpu_custom_call.1} parent=11 // pred_region
          %s284 = ssub.s32 512, 512
          %285 = vsyncadd [#allocation10], %s284
          %s286 = sshll.u32 [#allocation9], 4
          %s287 = int_to_ptr.vmem [resolvable:$true] %s286
          %292 = dma.hbm_to_vmem [thread:$0]  %s4, 512, %s287, [#allocation10], 128, 128, 8
        $region24: #{tpu_custom_call.1} parent=11 // pred_fallthru
          _
        // Predicated region
        $region25: #{tpu_custom_call.1} parent=11 // pred_check
          %p293 = pneg %p178
        $region26: #{tpu_custom_call.1} parent=11 // pred_check_branch
          %295 = sbr.rel (%p293) target = $region28
        $region27: #{tpu_custom_call.1} parent=11 // pred_region
          %s297 = ssub.s32 512, 512
          %298 = vsyncadd [#allocation10], %s297
          %s299 = sshll.u32 [#allocation11], 4
          %s300 = int_to_ptr.vmem [resolvable:$true] %s299
          %305 = dma.hbm_to_vmem [thread:$0]  %s5, 512, %s300, [#allocation10], 128, 128, 8
        $region28: #{tpu_custom_call.1} parent=11 // pred_fallthru
          _
        // Predicated region
        $region29: #{tpu_custom_call.1} parent=11 // pred_check
          %p306 = pneg %p199
        $region30: #{tpu_custom_call.1} parent=11 // pred_check_branch
          %308 = sbr.rel (%p306) target = $region32
        $region31: #{tpu_custom_call.1} parent=11 // pred_region
          _
        $region32: #{tpu_custom_call.1} parent=11 // pred_fallthru
          _
      $region12: #{tpu_custom_call.1} parent=5 // pred_fallthru
        _
      %p309 = scmp.lt.s32.totalorder %s28, 2
      // Predicated region
      $region33: #{tpu_custom_call.1} parent=5 // pred_check
        %p310 = pneg %p309
      $region34: #{tpu_custom_call.1} parent=5 // pred_check_branch
        %312 = sbr.rel (%p310) target = $region36
      $region35: #{tpu_custom_call.1} parent=5 // pred_region
        // Predicated region
        $region37: #{tpu_custom_call.1} parent=35 // pred_check
          %p313 = pneg %p62
        $region38: #{tpu_custom_call.1} parent=35 // pred_check_branch
          %315 = sbr.rel (%p313) target = $region40
        $region39: #{tpu_custom_call.1} parent=35 // pred_region
          %s316 = sand.u32 %s52, 1
          %s317 = scalar_lea.sflag [#allocation4], %s316
          %s318 = sand.u32 %s52, 1
          %s319 = smul.addr %s318, 64
          %s320 = scalar_lea.vmem [#allocation3], %s319
          %s321 = smul.u32 16, %s36
          %s323 = ssub.s32 1024, 1024
          %324 = vsyncadd %s317, %s323
          %s325 = smul.addr %s35, 16
          %s326 = sadd.s32 %s321, %s325
          %s327 = smul.addr %s326, 64
          %s328 = scalar_lea.hbm %s0, %s327
          %s330 = sshll.u32 %s320, 4
          %s331 = int_to_ptr.vmem [resolvable:$true] %s330
          %333 = dma.hbm_to_vmem [thread:$0]  %s328, 1024, %s331, %s317
        $region40: #{tpu_custom_call.1} parent=35 // pred_fallthru
          _
        // Predicated region
        $region41: #{tpu_custom_call.1} parent=35 // pred_check
          %p334 = pneg %p88
        $region42: #{tpu_custom_call.1} parent=35 // pred_check_branch
          %336 = sbr.rel (%p334) target = $region44
        $region43: #{tpu_custom_call.1} parent=35 // pred_region
          %s337 = sand.u32 %s28, 1
          %s338 = scalar_lea.sflag [#allocation7], %s337
          %s339 = sand.u32 %s78, 1
          %s340 = scalar_lea.vmem [#allocation6], %s339
          %s342 = ssub.s32 16, 16
          %343 = vsyncadd %s338, %s342
          %s344 = smul.addr %s35, 16
          %s345 = scalar_lea.hbm %s1, %s344
          %s347 = sshll.u32 %s340, 4
          %s348 = int_to_ptr.vmem [resolvable:$true] %s347
          %350 = dma.hbm_to_vmem [thread:$0]  %s345, 16, %s348, %s338
        $region44: #{tpu_custom_call.1} parent=35 // pred_fallthru
          _
      $region36: #{tpu_custom_call.1} parent=5 // pred_fallthru
        _
      %p351 = scmp.le.s32.totalorder 1, %s28
      %p352 = scmp.lt.s32.totalorder %s28, 3
      %p353 = pnand %p351, %p352
      %p354 = pneg %p353
      // Predicated region
      $region45: #{tpu_custom_call.1} parent=5 // pred_check
        _
      $region46: #{tpu_custom_call.1} parent=5 // pred_check_branch
        %356 = sbr.rel (%p353) target = $region48
      $region47: #{tpu_custom_call.1} parent=5 // pred_region
        %s357 = ssub.s32 %s28, 1
        %s358 = sand.u32 %s55, 1
        %s359 = scalar_lea.sflag [#allocation4], %s358
        %s360 = sand.u32 %s55, 1
        %s361 = smul.addr %s360, 64
        %s362 = scalar_lea.vmem [#allocation3], %s361
        // Predicated region
        $region49: #{tpu_custom_call.1} parent=47 // pred_check
          %p363 = pneg %p68
        $region50: #{tpu_custom_call.1} parent=47 // pred_check_branch
          %365 = sbr.rel (%p363) target = $region52
        $region51: #{tpu_custom_call.1} parent=47 // pred_region
          %366 = dma.done %s359, 1024
        $region52: #{tpu_custom_call.1} parent=47 // pred_fallthru
          _
        %s367 = sand.u32 %s33, 1
        %s368 = scalar_lea.sflag [#allocation7], %s367
        %s369 = sand.u32 %s81, 1
        %s370 = scalar_lea.vmem [#allocation6], %s369
        // Predicated region
        $region53: #{tpu_custom_call.1} parent=47 // pred_check
          %p371 = pneg %p94
        $region54: #{tpu_custom_call.1} parent=47 // pred_check_branch
          %373 = sbr.rel (%p371) target = $region56
        $region55: #{tpu_custom_call.1} parent=47 // pred_region
          %374 = dma.done %s368, 16
        $region56: #{tpu_custom_call.1} parent=47 // pred_fallthru
          _
        // Predicated region
        $region57: #{tpu_custom_call.1} parent=47 // pred_check
          %p375 = pneg %p115
        $region58: #{tpu_custom_call.1} parent=47 // pred_check_branch
          %377 = sbr.rel (%p375) target = $region60
        $region59: #{tpu_custom_call.1} parent=47 // pred_region
          %378 = dma.done [#allocation7], 64
        $region60: #{tpu_custom_call.1} parent=47 // pred_fallthru
          _
        // Predicated region
        $region61: #{tpu_custom_call.1} parent=47 // pred_check
          %p379 = pneg %p157
        $region62: #{tpu_custom_call.1} parent=47 // pred_check_branch
          %381 = sbr.rel (%p379) target = $region64
        $region63: #{tpu_custom_call.1} parent=47 // pred_region
          %382 = dma.done [#allocation10], 512
        $region64: #{tpu_custom_call.1} parent=47 // pred_fallthru
          _
        // Predicated region
        $region65: #{tpu_custom_call.1} parent=47 // pred_check
          %p383 = pneg %p178
        $region66: #{tpu_custom_call.1} parent=47 // pred_check_branch
          %385 = sbr.rel (%p383) target = $region68
        $region67: #{tpu_custom_call.1} parent=47 // pred_region
          %386 = dma.done [#allocation10], 512
        $region68: #{tpu_custom_call.1} parent=47 // pred_fallthru
          _
        %s387 = sand.u32 %s55, 1
        %s388 = scalar_lea.sflag [#allocation4], %s387
        %s389 = sand.u32 %s55, 1
        %s390 = smul.addr %s389, 64
        %s391 = scalar_lea.vmem [#allocation3], %s390
        %p392 = pneg %p68
        %p393 = pneg %p65
        %s394 = sand.u32 %s33, 1
        %s395 = scalar_lea.sflag [#allocation7], %s394
        %s396 = sand.u32 %s81, 1
        %s397 = scalar_lea.vmem [#allocation6], %s396
        %p398 = pneg %p94
        %p399 = pneg %p91
        %p400 = pneg %p115
        %p401 = pneg %p112
        %p402 = pneg %p136
        %p403 = pneg %p133
        %p404 = pneg %p157
        %p405 = pneg %p154
        %p406 = pneg %p178
        %p407 = pneg %p175
        %p408 = pneg %p199
        %p409 = pneg %p196
        %p410 = pneg %p225
        %p411 = pneg %p222
        %s412 = sand.u32 %s212, 1
        %s413 = scalar_lea.sflag [#allocation5], %s412
        %s414 = sand.u32 %s212, 1
        %s415 = scalar_lea.vmem [#allocation12], %s414
        %p416 = pneg %p251
        %p417 = pneg %p248
        %s418 = sand.u32 %s238, 1
        %s419 = scalar_lea.sflag [#allocation14], %s418
        %s420 = sand.u32 %s238, 1
        %s421 = scalar_lea.vmem [#allocation13], %s420
        %s422 = smul.u32 16, %s38
        %p423 = scmp.eq.s32.totalorder %s38, 0
        // Predicated region
        $region69: #{tpu_custom_call.1} parent=47 // pred_check
          %p424 = pneg %p423
        $region70: #{tpu_custom_call.1} parent=47 // pred_check_branch
          %426 = sbr.rel (%p424) target = $region72
        $region71: #{tpu_custom_call.1} parent=47 // pred_region
          %427 = vst [vmem:[#allocation2] sm:$0xff] 0.0
          %428 = vst [vmem:[#allocation2 + $0x8] sm:$0xff] 0.0
          %429 = vst [vmem:[#allocation2 + $0x10] sm:$0xff] 0.0
          %430 = vst [vmem:[#allocation2 + $0x18] sm:$0xff] 0.0
          %431 = vst [vmem:[#allocation2 + $0x20] sm:$0xff] 0.0
          %432 = vst [vmem:[#allocation2 + $0x28] sm:$0xff] 0.0
          %433 = vst [vmem:[#allocation2 + $0x30] sm:$0xff] 0.0
          %434 = vst [vmem:[#allocation2 + $0x38] sm:$0xff] 0.0
        $region72: #{tpu_custom_call.1} parent=47 // pred_fallthru
          _
        %v435 = vld [vmem:[%s362] sm:$0xff]
        %v436 = vld [vmem:[%s362 + $0x8] sm:$0xff]
        %v437 = vld [vmem:[%s362 + $0x10] sm:$0xff]
        %v438 = vld [vmem:[%s362 + $0x18] sm:$0xff]
        %v439 = vld [vmem:[%s362 + $0x20] sm:$0xff]
        %v440 = vld [vmem:[%s362 + $0x28] sm:$0xff]
        %v441 = vld [vmem:[%s362 + $0x30] sm:$0xff]
        %v442 = vld [vmem:[%s362 + $0x38] sm:$0xff]
        %v443 = vadd.f32 %v435, 0.0
        %v444 = vadd.f32 %v436, 0.0
        %v445 = vadd.f32 %v437, 0.0
        %v446 = vadd.f32 %v438, 0.0
        %v447 = vadd.f32 %v439, 0.0
        %v448 = vadd.f32 %v440, 0.0
        %v449 = vadd.f32 %v441, 0.0
        %v450 = vadd.f32 %v442, 0.0
        %v451 = vld [vmem:[#allocation2] sm:$0xff]
        %v452 = vld [vmem:[#allocation2 + $0x8] sm:$0xff]
        %v453 = vld [vmem:[#allocation2 + $0x10] sm:$0xff]
        %v454 = vld [vmem:[#allocation2 + $0x18] sm:$0xff]
        %v455 = vld [vmem:[#allocation2 + $0x20] sm:$0xff]
        %v456 = vld [vmem:[#allocation2 + $0x28] sm:$0xff]
        %v457 = vld [vmem:[#allocation2 + $0x30] sm:$0xff]
        %v458 = vld [vmem:[#allocation2 + $0x38] sm:$0xff]
        %v459 = vadd.f32 %v451, %v443
        %v460 = vadd.f32 %v452, %v444
        %v461 = vadd.f32 %v453, %v445
        %v462 = vadd.f32 %v454, %v446
        %v463 = vadd.f32 %v455, %v447
        %v464 = vadd.f32 %v456, %v448
        %v465 = vadd.f32 %v457, %v449
        %v466 = vadd.f32 %v458, %v450
        %467 = vst [vmem:[#allocation2] sm:$0xff] %v459
        %468 = vst [vmem:[#allocation2 + $0x8] sm:$0xff] %v460
        %469 = vst [vmem:[#allocation2 + $0x10] sm:$0xff] %v461
        %470 = vst [vmem:[#allocation2 + $0x18] sm:$0xff] %v462
        %471 = vst [vmem:[#allocation2 + $0x20] sm:$0xff] %v463
        %472 = vst [vmem:[#allocation2 + $0x28] sm:$0xff] %v464
        %473 = vst [vmem:[#allocation2 + $0x30] sm:$0xff] %v465
        %474 = vst [vmem:[#allocation2 + $0x38] sm:$0xff] %v466
        // Predicated region
        $region73: #{tpu_custom_call.1} parent=47 // pred_check
          %p475 = pneg %p423
        $region74: #{tpu_custom_call.1} parent=47 // pred_check_branch
          %477 = sbr.rel (%p475) target = $region76
        $region75: #{tpu_custom_call.1} parent=47 // pred_region
          %v478 = vld [vmem:[#allocation2] sm:$0xff]
          %v479 = vld [vmem:[#allocation2 + $0x8] sm:$0xff]
          %v480 = vld [vmem:[#allocation2 + $0x10] sm:$0xff]
          %v481 = vld [vmem:[#allocation2 + $0x18] sm:$0xff]
          %v482 = vld [vmem:[#allocation2 + $0x20] sm:$0xff]
          %v483 = vld [vmem:[#allocation2 + $0x28] sm:$0xff]
          %v484 = vld [vmem:[#allocation2 + $0x30] sm:$0xff]
          %v485 = vld [vmem:[#allocation2 + $0x38] sm:$0xff]
          %v494 = vcombine.high %v478, %v478
          %v495 = vcombine.high %v479, %v479
          %v496 = vcombine.high %v480, %v480
          %v497 = vcombine.high %v481, %v481
          %v498 = vcombine.high %v482, %v482
          %v499 = vcombine.high %v483, %v483
          %v500 = vcombine.high %v484, %v484
          %v501 = vcombine.high %v485, %v485
          %vm510 = vcmask 1043456
          %v511 = vsel %vm510, %v478, 0.0
          %v512 = vsel %vm510, %v494, 0.0
          %v513 = vadd.f32 %v511, %v512
          %v514 = vsel %vm510, %v479, 0.0
          %v515 = vadd.f32 %v513, %v514
          %v516 = vsel %vm510, %v495, 0.0
          %v517 = vadd.f32 %v515, %v516
          %v518 = vsel %vm510, %v480, 0.0
          %v519 = vadd.f32 %v517, %v518
          %v520 = vsel %vm510, %v496, 0.0
          %v521 = vadd.f32 %v519, %v520
          %v522 = vsel %vm510, %v481, 0.0
          %v523 = vadd.f32 %v521, %v522
          %v524 = vsel %vm510, %v497, 0.0
          %v525 = vadd.f32 %v523, %v524
          %v526 = vsel %vm510, %v482, 0.0
          %v527 = vadd.f32 %v525, %v526
          %v528 = vsel %vm510, %v498, 0.0
          %v529 = vadd.f32 %v527, %v528
          %v530 = vsel %vm510, %v483, 0.0
          %v531 = vadd.f32 %v529, %v530
          %v532 = vsel %vm510, %v499, 0.0
          %v533 = vadd.f32 %v531, %v532
          %v534 = vsel %vm510, %v484, 0.0
          %v535 = vadd.f32 %v533, %v534
          %v536 = vsel %vm510, %v500, 0.0
          %v537 = vadd.f32 %v535, %v536
          %v538 = vsel %vm510, %v485, 0.0
          %v539 = vadd.f32 %v537, %v538
          %v540 = vsel %vm510, %v501, 0.0
          %v541 = vadd.f32 %v539, %v540
          %542 = vadd.xlane.f32.xlu0 %v541
          %v543 = vpop.xlane.xlu0 %542
          %v544 = vmul.f32 %v543, 0.00048828125
          %v545 = vld [vmem:[#allocation8] sm:$0xf]
          %v546 = vld [vmem:[%s3] sm:$0x1]
          %v548 = vlaneseq
          %v549 = vand.u32 %v548, 127
          %v550 = vlaneseq
          %v551 = vshrl.u32 %v550, 7
          %v552 = vsub.s32 %v549, %v551
          %v553 = vrot.slane %v544, %v552
          %vm554 = vcmask 31744
          %v555 = vsel %vm554, %v553, 0
          %v558 = vsel %vm510, %v545, 0
          %560 = vmatprep.subr.mxu0 0.0
          %561 = vmatpush1.msra.mxu0 0.0
          %562 = vmatprep.subr.mxu0 0.0
          %563 = vmatpush1.msra.mxu0 0.0
          %564 = vmatprep.subr.mxu0 0.0
          %565 = vmatpush1.msra.mxu0 0.0
          %566 = vmatprep.subr.mxu0 0.0
          %567 = vmatpush1.msra.mxu0 0.0
          %568 = vmatprep.subr.mxu0 0.0
          %569 = vmatpush1.msra.mxu0 0.0
          %570 = vmatprep.subr.mxu0 0.0
          %571 = vmatpush1.msra.mxu0 0.0
          %572 = vmatprep.subr.mxu0 0.0
          %573 = vmatpush1.msra.mxu0 0.0
          %574 = vmatprep.subr.mxu0 0.0
          %575 = vmatpush1.msra.mxu0 0.0
          %576 = vmatprep.subr.mxu0 0.0
          %577 = vmatpush1.msra.mxu0 0.0
          %578 = vmatprep.subr.mxu0 0.0
          %579 = vmatpush1.msra.mxu0 0.0
          %580 = vmatprep.subr.mxu0 0.0
          %581 = vmatpush1.msra.mxu0 0.0
          %582 = vmatprep.subr.mxu0 0.0
          %583 = vmatpush1.msra.mxu0 0.0
          %584 = vmatprep.subr.mxu0 0.0
          %585 = vmatpush1.msra.mxu0 0.0
          %586 = vmatprep.subr.mxu0 0.0
          %587 = vmatpush1.msra.mxu0 0.0
          %588 = vmatprep.subr.mxu0 0.0
          %589 = vmatpush1.msra.mxu0 0.0
          %590 = vmatprep.subr.mxu0 0.0
          %591 = vmatpush1.msra.mxu0 %v558
          %592 = vmatprep.subr.mxu0 0.0
          %593 = vmatpush2.msra.mxu0 0.0
          %594 = vmatprep.subr.mxu0 0.0
          %595 = vmatpush2.msra.mxu0 0.0
          %596 = vmatprep.subr.mxu0 0.0
          %597 = vmatpush2.msra.mxu0 0.0
          %598 = vmatprep.subr.mxu0 0.0
          %599 = vmatpush2.msra.mxu0 0.0
          %600 = vmatprep.subr.mxu0 0.0
          %601 = vmatpush2.msra.mxu0 0.0
          %602 = vmatprep.subr.mxu0 0.0
          %603 = vmatpush2.msra.mxu0 0.0
          %604 = vmatprep.subr.mxu0 0.0
          %605 = vmatpush2.msra.mxu0 0.0
          %606 = vmatprep.subr.mxu0 0.0
          %607 = vmatpush2.msra.mxu0 0.0
          %608 = vmatprep.subr.mxu0 0.0
          %609 = vmatpush2.msra.mxu0 0.0
          %610 = vmatprep.subr.mxu0 0.0
          %611 = vmatpush2.msra.mxu0 0.0
          %612 = vmatprep.subr.mxu0 0.0
          %613 = vmatpush2.msra.mxu0 0.0
          %614 = vmatprep.subr.mxu0 0.0
          %615 = vmatpush2.msra.mxu0 0.0
          %616 = vmatprep.subr.mxu0 0.0
          %617 = vmatpush2.msra.mxu0 0.0
          %618 = vmatprep.subr.mxu0 0.0
          %619 = vmatpush2.msra.mxu0 0.0
          %620 = vmatprep.subr.mxu0 0.0
          %621 = vmatpush2.msra.mxu0 0.0
          %622 = vmatprep.subr.mxu0 0.0
          %623 = vmatpush2.msra.mxu0 0.0
          %624 = vmatprep.mubr.f32.mxu0 0.0
          %625 = vmatmul.mubr.f32.gmra.mxu0 %v555
          %v626 = vpop.f32.mrf.mxu0
          %v627 = vadd.f32 %v546, %v626
          %v628 = vpop.f32.mrf.mxu0
          %629 = vdwg.mxu0
          %v630 = vld [vmem:[#allocation9] sm:$0xff]
          %v631 = vld [vmem:[#allocation9 + $0x8] sm:$0xff]
          %v632 = vld [vmem:[#allocation9 + $0x10] sm:$0xff]
          %v633 = vld [vmem:[#allocation9 + $0x18] sm:$0xff]
          %v634 = vld [vmem:[%s370] sm:$0x1]
          %v635 = vld [vmem:[#allocation11] sm:$0xff]
          %v636 = vld [vmem:[#allocation11 + $0x8] sm:$0xff]
          %v637 = vld [vmem:[#allocation11 + $0x10] sm:$0xff]
          %v638 = vld [vmem:[#allocation11 + $0x18] sm:$0xff]
          %vm639 = vcmask 261120
          %v641 = vsel %vm639, %v634, 0
          %643 = vmatprep.subr.mxu0 0.0
          %644 = vmatpush1.msra.mxu0 0.0
          %645 = vmatprep.subr.mxu0 0.0
          %646 = vmatpush1.msra.mxu0 0.0
          %647 = vmatprep.subr.mxu0 0.0
          %648 = vmatpush1.msra.mxu0 0.0
          %649 = vmatprep.subr.mxu0 0.0
          %650 = vmatpush1.msra.mxu0 0.0
          %651 = vmatprep.subr.mxu0 0.0
          %652 = vmatpush1.msra.mxu0 0.0
          %653 = vmatprep.subr.mxu0 0.0
          %654 = vmatpush1.msra.mxu0 0.0
          %655 = vmatprep.subr.mxu0 0.0
          %656 = vmatpush1.msra.mxu0 0.0
          %657 = vmatprep.subr.mxu0 0.0
          %658 = vmatpush1.msra.mxu0 0.0
          %659 = vmatprep.subr.mxu0 0.0
          %660 = vmatpush1.msra.mxu0 0.0
          %661 = vmatprep.subr.mxu0 0.0
          %662 = vmatpush1.msra.mxu0 0.0
          %663 = vmatprep.subr.mxu0 0.0
          %664 = vmatpush1.msra.mxu0 0.0
          %665 = vmatprep.subr.mxu0 0.0
          %666 = vmatpush1.msra.mxu0 0.0
          %667 = vmatprep.subr.mxu0 0.0
          %668 = vmatpush1.msra.mxu0 %v638
          %669 = vmatprep.subr.mxu0 0.0
          %670 = vmatpush1.msra.mxu0 %v637
          %671 = vmatprep.subr.mxu0 0.0
          %672 = vmatpush1.msra.mxu0 %v636
          %673 = vmatprep.subr.mxu0 0.0
          %674 = vmatpush1.msra.mxu0 %v635
          %675 = vmatprep.subr.mxu0 0.0
          %676 = vmatpush2.msra.mxu0 0.0
          %677 = vmatprep.subr.mxu0 0.0
          %678 = vmatpush2.msra.mxu0 0.0
          %679 = vmatprep.subr.mxu0 0.0
          %680 = vmatpush2.msra.mxu0 0.0
          %681 = vmatprep.subr.mxu0 0.0
          %682 = vmatpush2.msra.mxu0 0.0
          %683 = vmatprep.subr.mxu0 0.0
          %684 = vmatpush2.msra.mxu0 0.0
          %685 = vmatprep.subr.mxu0 0.0
          %686 = vmatpush2.msra.mxu0 0.0
          %687 = vmatprep.subr.mxu0 0.0
          %688 = vmatpush2.msra.mxu0 0.0
          %689 = vmatprep.subr.mxu0 0.0
          %690 = vmatpush2.msra.mxu0 0.0
          %691 = vmatprep.subr.mxu0 0.0
          %692 = vmatpush2.msra.mxu0 0.0
          %693 = vmatprep.subr.mxu0 0.0
          %694 = vmatpush2.msra.mxu0 0.0
          %695 = vmatprep.subr.mxu0 0.0
          %696 = vmatpush2.msra.mxu0 0.0
          %697 = vmatprep.subr.mxu0 0.0
          %698 = vmatpush2.msra.mxu0 0.0
          %699 = vmatprep.subr.mxu0 0.0
          %700 = vmatpush2.msra.mxu0 0.0
          %701 = vmatprep.subr.mxu0 0.0
          %702 = vmatpush2.msra.mxu0 0.0
          %703 = vmatprep.subr.mxu0 0.0
          %704 = vmatpush2.msra.mxu0 0.0
          %705 = vmatprep.subr.mxu0 0.0
          %706 = vmatpush2.msra.mxu0 0.0
          %707 = vmatprep.mubr.f32.mxu0 0.0
          %708 = vmatmul.mubr.f32.gmra.mxu0 %v641
          %v709 = vpop.f32.mrf.mxu0
          %v710 = vadd.f32 0.0, %v709
          %v711 = vpop.f32.mrf.mxu0
          %712 = vdwg.mxu0
          %v714 = vsel %vm639, %v627, 0
          %716 = vmatprep.subr.mxu0 0.0
          %717 = vmatpush1.msra.mxu0 0.0
          %718 = vmatprep.subr.mxu0 0.0
          %719 = vmatpush1.msra.mxu0 0.0
          %720 = vmatprep.subr.mxu0 0.0
          %721 = vmatpush1.msra.mxu0 0.0
          %722 = vmatprep.subr.mxu0 0.0
          %723 = vmatpush1.msra.mxu0 0.0
          %724 = vmatprep.subr.mxu0 0.0
          %725 = vmatpush1.msra.mxu0 0.0
          %726 = vmatprep.subr.mxu0 0.0
          %727 = vmatpush1.msra.mxu0 0.0
          %728 = vmatprep.subr.mxu0 0.0
          %729 = vmatpush1.msra.mxu0 0.0
          %730 = vmatprep.subr.mxu0 0.0
          %731 = vmatpush1.msra.mxu0 0.0
          %732 = vmatprep.subr.mxu0 0.0
          %733 = vmatpush1.msra.mxu0 0.0
          %734 = vmatprep.subr.mxu0 0.0
          %735 = vmatpush1.msra.mxu0 0.0
          %736 = vmatprep.subr.mxu0 0.0
          %737 = vmatpush1.msra.mxu0 0.0
          %738 = vmatprep.subr.mxu0 0.0
          %739 = vmatpush1.msra.mxu0 0.0
          %740 = vmatprep.subr.mxu0 0.0
          %741 = vmatpush1.msra.mxu0 %v633
          %742 = vmatprep.subr.mxu0 0.0
          %743 = vmatpush1.msra.mxu0 %v632
          %744 = vmatprep.subr.mxu0 0.0
          %745 = vmatpush1.msra.mxu0 %v631
          %746 = vmatprep.subr.mxu0 0.0
          %747 = vmatpush1.msra.mxu0 %v630
          %748 = vmatprep.subr.mxu0 0.0
          %749 = vmatpush2.msra.mxu0 0.0
          %750 = vmatprep.subr.mxu0 0.0
          %751 = vmatpush2.msra.mxu0 0.0
          %752 = vmatprep.subr.mxu0 0.0
          %753 = vmatpush2.msra.mxu0 0.0
          %754 = vmatprep.subr.mxu0 0.0
          %755 = vmatpush2.msra.mxu0 0.0
          %756 = vmatprep.subr.mxu0 0.0
          %757 = vmatpush2.msra.mxu0 0.0
          %758 = vmatprep.subr.mxu0 0.0
          %759 = vmatpush2.msra.mxu0 0.0
          %760 = vmatprep.subr.mxu0 0.0
          %761 = vmatpush2.msra.mxu0 0.0
          %762 = vmatprep.subr.mxu0 0.0
          %763 = vmatpush2.msra.mxu0 0.0
          %764 = vmatprep.subr.mxu0 0.0
          %765 = vmatpush2.msra.mxu0 0.0
          %766 = vmatprep.subr.mxu0 0.0
          %767 = vmatpush2.msra.mxu0 0.0
          %768 = vmatprep.subr.mxu0 0.0
          %769 = vmatpush2.msra.mxu0 0.0
          %770 = vmatprep.subr.mxu0 0.0
          %771 = vmatpush2.msra.mxu0 0.0
          %772 = vmatprep.subr.mxu0 0.0
          %773 = vmatpush2.msra.mxu0 0.0
          %774 = vmatprep.subr.mxu0 0.0
          %775 = vmatpush2.msra.mxu0 0.0
          %776 = vmatprep.subr.mxu0 0.0
          %777 = vmatpush2.msra.mxu0 0.0
          %778 = vmatprep.subr.mxu0 0.0
          %779 = vmatpush2.msra.mxu0 0.0
          %780 = vmatprep.mubr.f32.mxu0 0.0
          %781 = vmatmul.mubr.f32.gmra.mxu0 %v714
          %v782 = vpop.f32.mrf.mxu0
          %v783 = vadd.f32 %v710, %v782
          %v784 = vpop.f32.mrf.mxu0
          %785 = vdwg.mxu0
          %v786 = vld [vmem:[%s6] sm:$0x1]
          %v787 = vadd.f32 %v783, %v786
          %vm788 = vcmask 253952
          %789 = vst.msk [vmem:[%s421] sm:$0x1] %vm788, %v627
          %790 = vst [vmem:[%s415] sm:$0x1] %v787
        $region76: #{tpu_custom_call.1} parent=47 // pred_fallthru
          _
        %s791 = sand.u32 %s212, 1
        %s792 = scalar_lea.sflag [#allocation5], %s791
        %s793 = sand.u32 %s212, 1
        %s794 = scalar_lea.vmem [#allocation12], %s793
        %s795 = sand.u32 %s238, 1
        %s796 = scalar_lea.sflag [#allocation14], %s795
        %s797 = sand.u32 %s238, 1
        %s798 = scalar_lea.vmem [#allocation13], %s797
        // Predicated region
        $region77: #{tpu_custom_call.1} parent=47 // pred_check
          %p799 = pneg %p222
        $region78: #{tpu_custom_call.1} parent=47 // pred_check_branch
          %801 = sbr.rel (%p799) target = $region80
        $region79: #{tpu_custom_call.1} parent=47 // pred_region
          %s803 = ssub.s32 16, 16
          %804 = vsyncadd %s792, %s803
          %s805 = smul.addr %s37, 16
          %s806 = scalar_lea.hbm %s7, %s805
          %s808 = sshll.u32 %s794, 4
          %s809 = int_to_ptr.vmem [resolvable:$true] %s808
          %811 = dma.vmem_to_hbm [thread:$0]  %s809, 16, %s806, %s792
        $region80: #{tpu_custom_call.1} parent=47 // pred_fallthru
          _
        // Predicated region
        $region81: #{tpu_custom_call.1} parent=47 // pred_check
          %p812 = pneg %p248
        $region82: #{tpu_custom_call.1} parent=47 // pred_check_branch
          %814 = sbr.rel (%p812) target = $region84
        $region83: #{tpu_custom_call.1} parent=47 // pred_region
          %s816 = ssub.s32 16, 16
          %817 = vsyncadd %s796, %s816
          %s818 = smul.addr %s37, 16
          %s819 = scalar_lea.hbm %s8, %s818
          %s821 = sshll.u32 %s798, 4
          %s822 = int_to_ptr.vmem [resolvable:$true] %s821
          %824 = dma.vmem_to_hbm [thread:$0]  %s822, 16, %s819, %s796
        $region84: #{tpu_custom_call.1} parent=47 // pred_fallthru
          _
      $region48: #{tpu_custom_call.1} parent=5 // pred_fallthru
        _
      %p825 = scmp.le.s32.totalorder 2, %s28
      // Predicated region
      $region85: #{tpu_custom_call.1} parent=5 // pred_check
        %p826 = pneg %p825
      $region86: #{tpu_custom_call.1} parent=5 // pred_check_branch
        %828 = sbr.rel (%p826) target = $region88
      $region87: #{tpu_custom_call.1} parent=5 // pred_region
        %s829 = ssub.s32 %s28, 2
        // Predicated region
        $region89: #{tpu_custom_call.1} parent=87 // pred_check
          %p830 = pneg %p228
        $region90: #{tpu_custom_call.1} parent=87 // pred_check_branch
          %832 = sbr.rel (%p830) target = $region92
        $region91: #{tpu_custom_call.1} parent=87 // pred_region
          %s833 = sand.u32 %s213, 1
          %s834 = scalar_lea.sflag [#allocation5], %s833
          %s835 = sand.u32 %s213, 1
          %s836 = scalar_lea.vmem [#allocation12], %s835
          %837 = dma.done %s834, 16
        $region92: #{tpu_custom_call.1} parent=87 // pred_fallthru
          _
        // Predicated region
        $region93: #{tpu_custom_call.1} parent=87 // pred_check
          %p838 = pneg %p254
        $region94: #{tpu_custom_call.1} parent=87 // pred_check_branch
          %840 = sbr.rel (%p838) target = $region96
        $region95: #{tpu_custom_call.1} parent=87 // pred_region
          %s841 = sand.u32 %s239, 1
          %s842 = scalar_lea.sflag [#allocation14], %s841
          %s843 = sand.u32 %s239, 1
          %s844 = scalar_lea.vmem [#allocation13], %s843
          %845 = dma.done %s842, 16
        $region96: #{tpu_custom_call.1} parent=87 // pred_fallthru
          _
      $region88: #{tpu_custom_call.1} parent=5 // pred_fallthru
        _
    $region6: #{tpu_custom_call.1} parent=1 // loop_footer
      %s32 = sadd.s32 1, %s28
    $region7: #{tpu_custom_call.1} parent=1 // loop_footer_branch
      %27 = sbr.rel target = $region3
    $region8: #{tpu_custom_call.1} parent=1 // loop_exit
      _
    %846 = vsyncpa [#allocation4], 1
    %s847 = scalar_lea.sflag [#allocation4], 1
    %848 = vsyncpa %s847, 1
    %849 = vsyncpa [#allocation7], 1
    %s850 = scalar_lea.sflag [#allocation7], 1
    %851 = vsyncpa %s850, 1
    %852 = vsyncpa [#allocation10], 1
    %853 = vsyncpa [#allocation5], 1
    %s854 = scalar_lea.sflag [#allocation5], 1
    %855 = vsyncpa %s854, 1
    %856 = vsyncpa [#allocation14], 1
    %s857 = scalar_lea.sflag [#allocation14], 1
    %858 = vsyncpa %s857, 1

</llo_original>
